<compile_context>
chip_gen: v5e
topology: v5e:2x2
jax: 0.10.0
libtpu: 0.0.40
codegen_flags: <defaults>
</compile_context>

<pallas_src>
import functools

import jax
import jax.numpy as jnp
from jax.experimental import pallas as pl
from jax.experimental.pallas import tpu as pltpu


def _round_up(x: int, m: int) -> int:
    return ((x + m - 1) // m) * m


def _mlp_kernel(x_ref, w1_ref, b1_ref, w2_ref, b2_ref, o_ref):
    # First linear + ReLU (MXU matmul, f32 accumulation; bias + ReLU on the VPU).
    h = jnp.dot(x_ref[...], w1_ref[...], preferred_element_type=jnp.float32)
    h = jnp.maximum(h + b1_ref[...], 0.0)
    # Second linear + ReLU.  Cast h to the weight dtype (no-op for f32; bf16
    # weights keep both matmul operands bf16 with f32 accumulation).
    y = jnp.dot(h.astype(w2_ref.dtype), w2_ref[...],
                preferred_element_type=jnp.float32)
    y = jnp.maximum(y + b2_ref[...], 0.0)
    o_ref[...] = y.astype(o_ref.dtype)


@functools.partial(jax.jit, static_argnames=("bm", "out_dtype"))
def _forward_impl(obs2d, w1, b1, w2, b2, *, bm, out_dtype):
    B, K = obs2d.shape
    H = w1.shape[1]
    N = w2.shape[1]

    # Biases as (1, H) / (1, N) rows — trivial metadata reshape, fused by XLA.
    b1_2d = b1.reshape(1, H)
    b2_2d = b2.reshape(1, N)

    grid = (pl.cdiv(B, bm),)
    return pl.pallas_call(
        _mlp_kernel,
        out_shape=jax.ShapeDtypeStruct((B, N), out_dtype),
        grid_spec=pltpu.PrefetchScalarGridSpec(
            num_scalar_prefetch=0,
            grid=grid,
            in_specs=[
                pl.BlockSpec((bm, K), lambda i: (i, 0)),   # x tile (native K)
                pl.BlockSpec((K, H), lambda i: (0, 0)),    # W1 (resident)
                pl.BlockSpec((1, H), lambda i: (0, 0)),    # b1 (resident)
                pl.BlockSpec((H, N), lambda i: (0, 0)),    # W2 (resident)
                pl.BlockSpec((1, N), lambda i: (0, 0)),    # b2 (resident)
            ],
            out_specs=pl.BlockSpec((bm, N), lambda i: (i, 0)),  # native N
        ),
        compiler_params=pltpu.CompilerParams(
            dimension_semantics=("parallel",),
        ),
    )(obs2d, w1, b1_2d, w2, b2_2d)


def pi_encoder_forward(obs, w1, b1, w2, b2, *, block_m=2048, out_dtype=None):
    """obs: [..., obs_dim]. Returns [..., feature_dim].

    block_m: rows per batch tile (sweepable; 2048 default amortizes per-step
    overhead while keeping tiles tiny in VMEM).  For big batches on v7x the
    multi-step grid is split across both TensorCores.
    out_dtype: optional output dtype (e.g. jnp.bfloat16 to halve output HBM
    writes); defaults to obs.dtype.
    """
    obs_dim = w1.shape[0]
    feature_dim = w2.shape[1]
    lead = obs.shape[:-1]
    obs2d = obs.reshape(-1, obs_dim)
    B = obs2d.shape[0]

    if B <= block_m:
        bm = B                                   # single full-extent block
    else:
        bm = _round_up(min(int(block_m), B), 8)  # multi-step grid, ragged tail OK

    if out_dtype is None:
        out_dtype = obs2d.dtype

    out = _forward_impl(obs2d, w1, b1, w2, b2, bm=bm,
                        out_dtype=jnp.dtype(out_dtype))
    return out.reshape(*lead, feature_dim)


def init_params(key, obs_dim, feature_dim, hidden=128):
    """Deterministic init mimicking nn.Linear's uniform(-1/sqrt(fan_in), +)."""
    k1, k2, k3, k4 = jax.random.split(key, 4)
    bound1 = 1.0 / jnp.sqrt(obs_dim)
    bound2 = 1.0 / jnp.sqrt(hidden)
    w1 = jax.random.uniform(k1, (obs_dim, hidden), jnp.float32, -bound1, bound1)
    b1 = jax.random.uniform(k2, (hidden,), jnp.float32, -bound1, bound1)
    w2 = jax.random.uniform(k3, (hidden, feature_dim), jnp.float32, -bound2, bound2)
    b2 = jax.random.uniform(k4, (feature_dim,), jnp.float32, -bound2, bound2)
    return w1, b1, w2, b2


if __name__ == "__main__":
    key = jax.random.PRNGKey(0)
    k_obs, k_params = jax.random.split(key)

    # Small shapes consistent with the module: obs_shape=(4, 4) -> obs_dim=16,
    # feature_dim=32, batch=16 (obs passed pre-flattened as [B, obs_dim]).
    obs_shape = (4, 4)
    obs_dim = int(obs_shape[0] * obs_shape[1])
    feature_dim = 32
    batch = 16

    obs = jax.random.normal(k_obs, (batch, obs_dim), jnp.float32)
    w1, b1, w2, b2 = init_params(k_params, obs_dim, feature_dim)

    # Reference in plain JAX (same math as the PyTorch module).
    ref = jnp.maximum(jnp.maximum(obs @ w1 + b1, 0.0) @ w2 + b2, 0.0)

    # f32 path: exact match expected.
    out = pi_encoder_forward(obs, w1, b1, w2, b2)
    out = jax.block_until_ready(out)
    assert out.shape == (batch, feature_dim)
    assert jnp.allclose(out, ref, atol=1e-5, rtol=1e-5)

    # bf16 path: params cast ONCE at load time (not per call), obs already bf16
    # in HBM; f32 accumulation + f32 bias/ReLU in the kernel, f32 output.
    w1_bf16 = w1.astype(jnp.bfloat16)
    w2_bf16 = w2.astype(jnp.bfloat16)
    obs_bf16 = obs.astype(jnp.bfloat16)
    out_bf16 = pi_encoder_forward(obs_bf16, w1_bf16, b1, w2_bf16, b2,
                                  out_dtype=jnp.float32)
    out_bf16 = jax.block_until_ready(out_bf16)
    assert out_bf16.shape == (batch, feature_dim)
    assert jnp.allclose(out_bf16, ref, atol=1.5e-1, rtol=1e-1)

    print("KERNEL_OK")
</pallas_src>

<mosaic_0001>
module attributes {stable_mosaic.version = 11 : i64} {
  func.func @_mlp_kernel(%arg0: i32, %arg1: memref<16x16xf32, #tpu.memory_space<vmem>>, %arg2: memref<16x128xf32, #tpu.memory_space<vmem>>, %arg3: memref<1x128xf32, #tpu.memory_space<vmem>>, %arg4: memref<128x32xf32, #tpu.memory_space<vmem>>, %arg5: memref<1x32xf32, #tpu.memory_space<vmem>>, %arg6: memref<16x32xf32, #tpu.memory_space<vmem>>) attributes {dimension_semantics = [#tpu.dimension_semantics<parallel>], iteration_bounds = array<i64: 1>, scalar_prefetch = 0 : i64, scratch_operands = 0 : i64, tpu.core_type = #tpu.core_type<tc>, window_params = [{transform_indices = @transform_0, window_bounds = array<i64: 16, 16>}, {pipeline_mode = #tpu.pipeline_mode<synchronous>, transform_indices = @transform_1, window_bounds = array<i64: 16, 128>}, {pipeline_mode = #tpu.pipeline_mode<synchronous>, transform_indices = @transform_2, window_bounds = array<i64: 1, 128>}, {pipeline_mode = #tpu.pipeline_mode<synchronous>, transform_indices = @transform_3, window_bounds = array<i64: 128, 32>}, {pipeline_mode = #tpu.pipeline_mode<synchronous>, transform_indices = @transform_4, window_bounds = array<i64: 1, 32>}, {transform_indices = @transform_5, window_bounds = array<i64: 16, 32>}]} {
    %c0 = arith.constant 0 : index
    %c0_0 = arith.constant 0 : index
    %0 = vector.load %arg1[%c0, %c0_0] : memref<16x16xf32, #tpu.memory_space<vmem>>, vector<16x16xf32>
    %c0_1 = arith.constant 0 : index
    %c0_2 = arith.constant 0 : index
    %1 = vector.load %arg2[%c0_1, %c0_2] : memref<16x128xf32, #tpu.memory_space<vmem>>, vector<16x128xf32>
    %cst = arith.constant dense<0.000000e+00> : vector<16x128xf32>
    %2 = tpu.matmul %0, %1, %cst {dimension_numbers = #tpu.dot_dimension_numbers<[1], [0], [0], [1], [0, 0, 1, 1], [], []>} : vector<16x16xf32>, vector<16x128xf32>, vector<16x128xf32> -> vector<16x128xf32>
    %c0_3 = arith.constant 0 : index
    %c0_4 = arith.constant 0 : index
    %3 = vector.load %arg3[%c0_3, %c0_4] : memref<1x128xf32, #tpu.memory_space<vmem>>, vector<1x128xf32>
    %4 = vector.broadcast %3 : vector<1x128xf32> to vector<16x128xf32>
    %5 = arith.addf %2, %4 : vector<16x128xf32>
    %cst_5 = arith.constant 0.000000e+00 : f32
    %6 = vector.broadcast %cst_5 : f32 to vector<16x128xf32>
    %7 = arith.maximumf %5, %6 : vector<16x128xf32>
    %c0_6 = arith.constant 0 : index
    %c0_7 = arith.constant 0 : index
    %8 = vector.load %arg4[%c0_6, %c0_7] : memref<128x32xf32, #tpu.memory_space<vmem>>, vector<128x32xf32>
    %cst_8 = arith.constant dense<0.000000e+00> : vector<16x32xf32>
    %9 = tpu.matmul %7, %8, %cst_8 {dimension_numbers = #tpu.dot_dimension_numbers<[1], [0], [0], [1], [0, 0, 1, 1], [], []>} : vector<16x128xf32>, vector<128x32xf32>, vector<16x32xf32> -> vector<16x32xf32>
    %c0_9 = arith.constant 0 : index
    %c0_10 = arith.constant 0 : index
    %10 = vector.load %arg5[%c0_9, %c0_10] : memref<1x32xf32, #tpu.memory_space<vmem>>, vector<1x32xf32>
    %11 = vector.broadcast %10 : vector<1x32xf32> to vector<16x32xf32>
    %12 = arith.addf %9, %11 : vector<16x32xf32>
    %cst_11 = arith.constant 0.000000e+00 : f32
    %13 = vector.broadcast %cst_11 : f32 to vector<16x32xf32>
    %14 = arith.maximumf %12, %13 : vector<16x32xf32>
    %c0_12 = arith.constant 0 : index
    %c0_13 = arith.constant 0 : index
    %15 = vector.load %arg6[%c0_12, %c0_13] : memref<16x32xf32, #tpu.memory_space<vmem>>, vector<16x32xf32>
    tpu.vector_store %arg6[%c0_12, %c0_13], %14 {strides = array<i32>} : memref<16x32xf32, #tpu.memory_space<vmem>>, vector<16x32xf32>,
    return
  }
  func.func @transform_0(%arg0: i32) -> (i32, i32) {
    %c0_i32 = arith.constant 0 : i32
    %c0_i32_0 = arith.constant 0 : i32
    return %arg0, %c0_i32 : i32, i32
  }
  func.func @transform_1(%arg0: i32) -> (i32, i32) {
    %c0_i32 = arith.constant 0 : i32
    %c0_i32_0 = arith.constant 0 : i32
    %c0_i32_1 = arith.constant 0 : i32
    return %c0_i32, %c0_i32_0 : i32, i32
  }
  func.func @transform_2(%arg0: i32) -> (i32, i32) {
    %c0_i32 = arith.constant 0 : i32
    %c0_i32_0 = arith.constant 0 : i32
    %c0_i32_1 = arith.constant 0 : i32
    return %c0_i32, %c0_i32_0 : i32, i32
  }
  func.func @transform_3(%arg0: i32) -> (i32, i32) {
    %c0_i32 = arith.constant 0 : i32
    %c0_i32_0 = arith.constant 0 : i32
    %c0_i32_1 = arith.constant 0 : i32
    return %c0_i32, %c0_i32_0 : i32, i32
  }
  func.func @transform_4(%arg0: i32) -> (i32, i32) {
    %c0_i32 = arith.constant 0 : i32
    %c0_i32_0 = arith.constant 0 : i32
    %c0_i32_1 = arith.constant 0 : i32
    return %c0_i32, %c0_i32_0 : i32, i32
  }
  func.func @transform_5(%arg0: i32) -> (i32, i32) {
    %c0_i32 = arith.constant 0 : i32
    %c0_i32_0 = arith.constant 0 : i32
    return %arg0, %c0_i32 : i32, i32
  }
}

</mosaic_0001>

<llo_original>
// kernel: _forward_impl.1
$region0: #{_forward_impl.1}
  #allocation0 [shape = 'u32[]', space=smem, size = 0x4, offset = 0x4, fixed_abs, tag = 'smem constant byte address 0x4 - core index']
  #allocation1 [shape = 'u32[72,128]{1,0:T(1,128)}', space=vmem, size = 0x9000, scoped, tag = 'internal scratch']
  %s0 = inlined_call_operand.vmem [shape: f32[16,16], index: 0, kind: input, shape index: {}]
  %s1 = inlined_call_operand.vmem [shape: f32[16,128], index: 1, kind: input, shape index: {}]
  %s2 = inlined_call_operand.vmem [shape: f32[1,128], index: 2, kind: input, shape index: {}]
  %s3 = inlined_call_operand.vmem [shape: f32[128,32], index: 3, kind: input, shape index: {}]
  %s4 = inlined_call_operand.vmem [shape: f32[1,32], index: 4, kind: input, shape index: {}]
  %s5 = inlined_call_operand.hbm [shape: f32[16,32], index: 5, kind: output, shape index: {}]
  %s6 = sld [smem:[#allocation0]]
  $region30: #{_forward_impl.1} parent=0
    _
  %s8 = ssub.s32 1, %s6
  %s9 = scalar_select 0, %s8, %s6
  $region1: #{_forward_impl.1} parent=0
    #allocation2 [shape = 'u8[8192]{0}', space=vmem, size = 0x2000, scoped, tag = 'output window, operand 0, single buffered']
    #allocation3 [shape = 's32[1]{0}', space=sflag, size = 0x4, scoped, tag = 'scoped memory for _forward_impl.1']
    %10 = vsyncpa [#allocation3], 0
    // Predicated region
    $region2: #{_forward_impl.1} parent=1 // pred_check
      _
    $region3: #{_forward_impl.1} parent=1 // pred_check_branch
      %12 = sbr.rel (0) target = $region5
    $region4: #{_forward_impl.1} parent=1 // pred_region
      _
    $region5: #{_forward_impl.1} parent=1 // pred_fallthru
      _
    // Predicated region
    $region6: #{_forward_impl.1} parent=1 // pred_check
      _
    $region7: #{_forward_impl.1} parent=1 // pred_check_branch
      %14 = sbr.rel (0) target = $region9
    $region8: #{_forward_impl.1} parent=1 // pred_region
      _
    $region9: #{_forward_impl.1} parent=1 // pred_fallthru
      _
    // Predicated region
    $region10: #{_forward_impl.1} parent=1 // pred_check
      _
    $region11: #{_forward_impl.1} parent=1 // pred_check_branch
      %16 = sbr.rel (0) target = $region13
    $region12: #{_forward_impl.1} parent=1 // pred_region
      _
    $region13: #{_forward_impl.1} parent=1 // pred_fallthru
      _
    // Predicated region
    $region14: #{_forward_impl.1} parent=1 // pred_check
      _
    $region15: #{_forward_impl.1} parent=1 // pred_check_branch
      %18 = sbr.rel (0) target = $region17
    $region16: #{_forward_impl.1} parent=1 // pred_region
      _
    $region17: #{_forward_impl.1} parent=1 // pred_fallthru
      _
    // Predicated region
    $region18: #{_forward_impl.1} parent=1 // pred_check
      _
    $region19: #{_forward_impl.1} parent=1 // pred_check_branch
      %20 = sbr.rel (0) target = $region21
    $region20: #{_forward_impl.1} parent=1 // pred_region
      _
    $region21: #{_forward_impl.1} parent=1 // pred_fallthru
      _
    %v21 = vld [vmem:[%s0] sm:$0xff]
    %v22 = vld [vmem:[%s0 + $0x8] sm:$0xff]
    %v23 = vld [vmem:[%s1] sm:$0xff]
    %v24 = vld [vmem:[%s1 + $0x8] sm:$0xff]
    %v25 = vld [vmem:[%s2] sm:$0x1]
    %v27 = vperm.slane %v25, 0
    %vm29 = vcmask 130048
    %v31 = vsel %vm29, %v21, 0
    %v34 = vsel %vm29, %v22, 0
    %36 = vmatpush.msra.mxu0 0.0
    %37 = vmatpush.msra.mxu0 0.0
    %38 = vmatpush.msra.mxu0 0.0
    %39 = vmatpush.msra.mxu0 0.0
    %40 = vmatpush.msra.mxu0 0.0
    %41 = vmatpush.msra.mxu0 0.0
    %42 = vmatpush.msra.mxu0 0.0
    %43 = vmatpush.msra.mxu0 0.0
    %44 = vmatpush.msra.mxu0 0.0
    %45 = vmatpush.msra.mxu0 0.0
    %46 = vmatpush.msra.mxu0 0.0
    %47 = vmatpush.msra.mxu0 0.0
    %48 = vmatpush.msra.mxu0 0.0
    %49 = vmatpush.msra.mxu0 0.0
    %50 = vmatpush.msra.mxu0 %v24
    %51 = vmatpush.msra.mxu0 %v23
    %52 = vmatmul.f32.gmra.mxu0 %v31
    %v53 = vpop.f32.mrf.mxu0
    %v54 = vadd.f32 %v27, %v53
    %55 = vmatmul.f32.gmra.mxu0 %v34
    %v56 = vpop.f32.mrf.mxu0
    %v57 = vadd.f32 %v27, %v56
    %58 = vdwg.mxu0
    %v59 = vmax.f32 %v54, 0.0
    %v60 = vmax.f32 %v57, 0.0
    %v61 = vld [vmem:[%s3] sm:$0xff]
    %v62 = vld [vmem:[%s3 + $0x8] sm:$0xff]
    %v63 = vld [vmem:[%s3 + $0x10] sm:$0xff]
    %v64 = vld [vmem:[%s3 + $0x18] sm:$0xff]
    %v65 = vld [vmem:[%s3 + $0x20] sm:$0xff]
    %v66 = vld [vmem:[%s3 + $0x28] sm:$0xff]
    %v67 = vld [vmem:[%s3 + $0x30] sm:$0xff]
    %v68 = vld [vmem:[%s3 + $0x38] sm:$0xff]
    %v69 = vld [vmem:[%s3 + $0x40] sm:$0xff]
    %v70 = vld [vmem:[%s3 + $0x48] sm:$0xff]
    %v71 = vld [vmem:[%s3 + $0x50] sm:$0xff]
    %v72 = vld [vmem:[%s3 + $0x58] sm:$0xff]
    %v73 = vld [vmem:[%s3 + $0x60] sm:$0xff]
    %v74 = vld [vmem:[%s3 + $0x68] sm:$0xff]
    %v75 = vld [vmem:[%s3 + $0x70] sm:$0xff]
    %v76 = vld [vmem:[%s3 + $0x78] sm:$0xff]
    %v77 = vld [vmem:[%s4] sm:$0x1]
    %v79 = vperm.slane %v77, 0
    %81 = vmatpush.msra.mxu0 %v76
    %82 = vmatpush.msra.mxu0 %v75
    %83 = vmatpush.msra.mxu0 %v74
    %84 = vmatpush.msra.mxu0 %v73
    %85 = vmatpush.msra.mxu0 %v72
    %86 = vmatpush.msra.mxu0 %v71
    %87 = vmatpush.msra.mxu0 %v70
    %88 = vmatpush.msra.mxu0 %v69
    %89 = vmatpush.msra.mxu0 %v68
    %90 = vmatpush.msra.mxu0 %v67
    %91 = vmatpush.msra.mxu0 %v66
    %92 = vmatpush.msra.mxu0 %v65
    %93 = vmatpush.msra.mxu0 %v64
    %94 = vmatpush.msra.mxu0 %v63
    %95 = vmatpush.msra.mxu0 %v62
    %96 = vmatpush.msra.mxu0 %v61
    %97 = vmatmul.f32.gmra.mxu0 %v59
    %v98 = vpop.f32.mrf.mxu0
    %v99 = vadd.f32 %v79, %v98
    %100 = vmatmul.f32.gmra.mxu0 %v60
    %v101 = vpop.f32.mrf.mxu0
    %v102 = vadd.f32 %v79, %v101
    %103 = vdwg.mxu0
    %v104 = vmax.f32 %v99, 0.0
    %v105 = vmax.f32 %v102, 0.0
    %vm106 = vcmask 261120
    %107 = vst.msk [vmem:[#allocation2] sm:$0xff] %vm106, %v104
    %108 = vst.msk [vmem:[#allocation2 + $0x8] sm:$0xff] %vm106, %v105
    // Predicated region
    $region22: #{_forward_impl.1} parent=1 // pred_check
      _
    $region23: #{_forward_impl.1} parent=1 // pred_check_branch
      %110 = sbr.rel (0) target = $region25
    $region24: #{_forward_impl.1} parent=1 // pred_region
      %112 = vsyncadd [#allocation3], 0
      %s113 = sshll.u32 [#allocation2], 4
      %s114 = int_to_ptr.vmem [resolvable:$true] %s113
      %s115 = sshll.u32 %s5, 4
      %s116 = int_to_ptr.hbm [resolvable:$true] %s115
      %121 = dma.vmem_to_hbm [thread:$0]  %s114, 256, %s116, [#allocation3], 128, 128, 8
    $region25: #{_forward_impl.1} parent=1 // pred_fallthru
      _
    // Predicated region
    $region26: #{_forward_impl.1} parent=1 // pred_check
      _
    $region27: #{_forward_impl.1} parent=1 // pred_check_branch
      %123 = sbr.rel (0) target = $region29
    $region28: #{_forward_impl.1} parent=1 // pred_region
      %125 = dma.done [#allocation3], 256
    $region29: #{_forward_impl.1} parent=1 // pred_fallthru
      _
    %126 = vsyncpa [#allocation3], 1

</llo_original>
